<compile_context>
chip_gen: v5e
topology: v5e:2x2
jax: 0.10.0
libtpu: 0.0.40
codegen_flags: <defaults>
</compile_context>

<pallas_src>
import jax
import jax.numpy as jnp
from jax.experimental import pallas as pl
from jax.experimental.pallas import tpu as pltpu

# Per-input block budget.  Pallas double-buffers each input, so ~2x this
# lands in VMEM; we set vmem_limit_bytes accordingly on the mean path.
_DEFAULT_BLOCK_BYTES = 8 * 1024 * 1024


def _sublane_rows(dtype) -> int:
    """Dtype-aware sublane multiple: 8 rows f32, 16 bf16, 32 int8/fp8."""
    return max(8, 32 // jnp.dtype(dtype).itemsize)


def _pick_batch_tile(B: int, m: int) -> int:
    """Batch tile for the (b_tile, H) output block.

    Legal iff it divides B and is either == B or a multiple of m (second-minor
    tiling rule).  Kept <= 16 to bound the accumulator's vreg footprint, and
    capped at B//2 when possible so the 'parallel' batch grid axis has at
    least 2 steps (both v7x TensorCores get work)."""
    max_tile = max(m, 16)
    if B >= 2 * m:
        max_tile = min(max_tile, B // 2)
    for d in range(min(B, max_tile), 0, -1):
        if B % d == 0 and (d == B or d % m == 0):
            return d
    return B


def _pick_seq_tile(S: int, max_rows: int, m: int) -> int:
    """Sequence tile for the mean path.

    Returns S itself if it fits the budget (full-extent blocks are always
    legal).  Otherwise returns a multiple of m <= max_rows, preferring a
    divisor of S; if no divisor exists the caller uses a cdiv grid and the
    kernel masks the final partial block."""
    max_rows = max(m, max_rows)
    if S <= max_rows:
        return S
    max_mult = max_rows - (max_rows % m)
    for d in range(max_mult, m - 1, -m):
        if S % d == 0:
            return d
    return max_mult


def _cls_kernel(x_ref, o_ref):
    # x_ref: (b_tile, s_tile, H) -- only sequence block 0 is ever DMA'd, and
    # s_tile is the smallest legal sublane tile, so almost nothing beyond the
    # CLS row is copied from HBM.
    o_ref[...] = x_ref[:, 0, :]


def _make_mean_kernel(inv_s: float, s_tile: int, S: int, *, use_scratch: bool):
    """Sequence-mean kernel: f32 running sum over the trailing 'arbitrary'
    sequence grid axis, scaled by 1/S on the last step.

    If S % s_tile != 0 the final (partial) sequence block is masked with a
    broadcasted_iota over the sequence sublane index, so out-of-range rows
    (whose contents are undefined) never reach the accumulator."""
    needs_mask = (S % s_tile) != 0

    def _accumulate(x_ref, acc_ref, s):
        xv = x_ref[...].astype(jnp.float32)
        if needs_mask:
            row = jax.lax.broadcasted_iota(jnp.int32, xv.shape, 1)
            valid = (s * s_tile + row) < S
            xv = jnp.where(valid, xv, 0.0)
        acc_ref[...] += jnp.sum(xv, axis=1)

    if use_scratch:
        # Non-f32 output: accumulate in an f32 VMEM scratch, cast at the end.
        def kernel(x_ref, o_ref, acc_ref):
            s = pl.program_id(1)

            @pl.when(s == 0)
            def _():
                acc_ref[...] = jnp.zeros_like(acc_ref)

            _accumulate(x_ref, acc_ref, s)

            @pl.when(s == pl.num_programs(1) - 1)
            def _():
                o_ref[...] = (acc_ref[...] * inv_s).astype(o_ref.dtype)

        return kernel

    # f32 output: accumulate directly into the resident output block.
    def kernel(x_ref, o_ref):
        s = pl.program_id(1)

        @pl.when(s == 0)
        def _():
            o_ref[...] = jnp.zeros_like(o_ref)

        _accumulate(x_ref, o_ref, s)

        @pl.when(s == pl.num_programs(1) - 1)
        def _():
            o_ref[...] = o_ref[...] * inv_s

    return kernel


def bert_pooling_layer(x, avg: str = "cls", *,
                       block_bytes: int = _DEFAULT_BLOCK_BYTES):
    """Pallas implementation of BertPoolingLayer.forward. x: (B, S, H) -> (B, H)."""
    B, S, H = x.shape
    itemsize = jnp.dtype(x.dtype).itemsize
    m = _sublane_rows(x.dtype)
    b_tile = _pick_batch_tile(B, m)

    if avg == "cls":
        # Only sequence-block 0 (m rows, always in-bounds when S >= m) is
        # ever DMA'd HBM -> VMEM.
        s_tile = m if S >= m else S
        grid = (B // b_tile,)
        return pl.pallas_call(
            _cls_kernel,
            out_shape=jax.ShapeDtypeStruct((B, H), x.dtype),
            grid_spec=pltpu.PrefetchScalarGridSpec(
                num_scalar_prefetch=0,
                grid=grid,
                in_specs=[pl.BlockSpec((b_tile, s_tile, H),
                                       lambda b: (b, 0, 0))],
                out_specs=pl.BlockSpec((b_tile, H), lambda b: (b, 0)),
            ),
            compiler_params=pltpu.CompilerParams(
                dimension_semantics=("parallel",)
            ),
        )(x)

    # Mean over the sequence axis: batch is "parallel", sequence is the
    # trailing "arbitrary" reduction axis.
    use_scratch = jnp.dtype(x.dtype) != jnp.dtype(jnp.float32)
    max_rows = block_bytes // max(1, b_tile * H * itemsize)
    s_tile = _pick_seq_tile(S, max_rows, m)
    grid = (B // b_tile, pl.cdiv(S, s_tile))

    in_block_bytes = b_tile * s_tile * H * itemsize
    out_block_bytes = b_tile * H * itemsize
    scratch_bytes = b_tile * H * 4 if use_scratch else 0
    # 2x for double-buffered input/output blocks, plus headroom for compiler
    # internals.  Explicit so raising block_bytes never trips the chip's
    # default scoped-VMEM limit (16 MiB on v5e, 32 MiB on v6e/v7x).
    vmem_limit = int(2 * in_block_bytes + 2 * out_block_bytes
                     + scratch_bytes + (2 << 20))

    scratch_shapes = [pltpu.VMEM((b_tile, H), jnp.float32)] if use_scratch else []

    return pl.pallas_call(
        _make_mean_kernel(1.0 / S, s_tile, S, use_scratch=use_scratch),
        out_shape=jax.ShapeDtypeStruct((B, H), x.dtype),
        grid_spec=pltpu.PrefetchScalarGridSpec(
            num_scalar_prefetch=0,
            grid=grid,
            in_specs=[pl.BlockSpec((b_tile, s_tile, H),
                                   lambda b, s: (b, s, 0))],
            out_specs=pl.BlockSpec((b_tile, H), lambda b, s: (b, 0)),
            scratch_shapes=scratch_shapes,
        ),
        compiler_params=pltpu.CompilerParams(
            dimension_semantics=("parallel", "arbitrary"),
            vmem_limit_bytes=vmem_limit,
        ),
        cost_estimate=pl.CostEstimate(
            flops=B * S * H,
            transcendentals=0,
            bytes_accessed=B * S * H * itemsize + B * H * itemsize,
        ),
    )(x)


if __name__ == "__main__":
    key, key2 = jax.random.split(jax.random.PRNGKey(0))

    # Small shapes consistent with the module: (batch, seq, hidden).
    B, S, H = 2, 8, 32
    x = jax.random.normal(key, (B, S, H), dtype=jnp.float32)

    y_cls = bert_pooling_layer(x, avg="cls")
    jax.block_until_ready(y_cls)
    assert y_cls.shape == (B, H)
    assert jnp.allclose(y_cls, x[:, 0, :], atol=1e-6), "cls pooling mismatch"

    y_mean = bert_pooling_layer(x, avg="mean")
    jax.block_until_ready(y_mean)
    assert y_mean.shape == (B, H)
    assert jnp.allclose(y_mean, jnp.mean(x, axis=1), atol=1e-5), \
        "mean pooling mismatch"

    # A second (still small) shape that exercises the tiled / masked paths:
    #  - S = 197 is not a multiple of 8: CLS still reads only 8 rows, and
    #    mean uses a non-divisor s_tile with a masked final partial block.
    #  - mean accumulates across multiple sequence grid steps (tiny budget),
    #    and batch splits into 2 "parallel" grid steps.
    B2, S2, H2 = 16, 197, 256
    x2 = jax.random.normal(key2, (B2, S2, H2), dtype=jnp.float32)

    y2_cls = bert_pooling_layer(x2, avg="cls")
    jax.block_until_ready(y2_cls)
    assert jnp.allclose(y2_cls, x2[:, 0, :], atol=1e-6), \
        "cls pooling mismatch (tiled)"

    y2_mean = bert_pooling_layer(x2, avg="mean", block_bytes=64 * 1024)
    jax.block_until_ready(y2_mean)
    assert jnp.allclose(y2_mean, jnp.mean(x2, axis=1), atol=1e-5, rtol=1e-5), \
        "mean pooling mismatch (tiled, masked)"

    # bf16 exercises the dtype-aware sublane tiling (16-row blocks) and the
    # f32-scratch accumulator path.
    x3 = x2.astype(jnp.bfloat16)

    y3_cls = bert_pooling_layer(x3, avg="cls")
    jax.block_until_ready(y3_cls)
    assert jnp.array_equal(y3_cls, x3[:, 0, :]), "cls pooling mismatch (bf16)"

    y3_mean = bert_pooling_layer(x3, avg="mean", block_bytes=32 * 1024)
    jax.block_until_ready(y3_mean)
    ref3 = jnp.mean(x3.astype(jnp.float32), axis=1)
    assert jnp.allclose(y3_mean.astype(jnp.float32), ref3, atol=1e-2), \
        "mean pooling mismatch (bf16)"

    print("KERNEL_OK")
</pallas_src>

<mosaic_0001>
module attributes {stable_mosaic.version = 11 : i64} {
  func.func @_cls_kernel(%arg0: i32, %arg1: memref<2x8x32xf32, #tpu.memory_space<vmem>>, %arg2: memref<2x32xf32, #tpu.memory_space<vmem>>) attributes {dimension_semantics = [#tpu.dimension_semantics<parallel>], iteration_bounds = array<i64: 1>, scalar_prefetch = 0 : i64, scratch_operands = 0 : i64, tpu.core_type = #tpu.core_type<tc>, window_params = [{transform_indices = @transform_0, window_bounds = array<i64: 2, 8, 32>}, {transform_indices = @transform_1, window_bounds = array<i64: 2, 32>}]} {
    %c0 = arith.constant 0 : index
    %c0_0 = arith.constant 0 : index
    %c0_1 = arith.constant 0 : index
    %0 = vector.load %arg1[%c0, %c0_0, %c0_1] : memref<2x8x32xf32, #tpu.memory_space<vmem>>, vector<2x1x32xf32>
    %1 = vector.shape_cast %0 : vector<2x1x32xf32> to vector<2x32xf32>
    %c0_2 = arith.constant 0 : index
    %c0_3 = arith.constant 0 : index
    %2 = vector.load %arg2[%c0_2, %c0_3] : memref<2x32xf32, #tpu.memory_space<vmem>>, vector<2x32xf32>
    tpu.vector_store %arg2[%c0_2, %c0_3], %1 {strides = array<i32>} : memref<2x32xf32, #tpu.memory_space<vmem>>, vector<2x32xf32>,
    return
  }
  func.func @transform_0(%arg0: i32) -> (i32, i32, i32) {
    %c0_i32 = arith.constant 0 : i32
    %c0_i32_0 = arith.constant 0 : i32
    %c0_i32_1 = arith.constant 0 : i32
    return %arg0, %c0_i32, %c0_i32_0 : i32, i32, i32
  }
  func.func @transform_1(%arg0: i32) -> (i32, i32) {
    %c0_i32 = arith.constant 0 : i32
    %c0_i32_0 = arith.constant 0 : i32
    return %arg0, %c0_i32 : i32, i32
  }
}

</mosaic_0001>

<llo_original>
// kernel: tpu_custom_call.1
$region0: #{tpu_custom_call.1}
  #allocation0 [shape = 'u32[]', space=smem, size = 0x4, offset = 0x4, fixed_abs, tag = 'smem constant byte address 0x4 - core index']
  #allocation1 [shape = 'u32[72,128]{1,0:T(1,128)}', space=vmem, size = 0x9000, scoped, tag = 'internal scratch']
  %s0 = inlined_call_operand.hbm [shape: f32[2,8,32], index: 0, kind: input, shape index: {}]
  %s1 = inlined_call_operand.hbm [shape: f32[2,32], index: 1, kind: output, shape index: {}]
  %s2 = sld [smem:[#allocation0]]
  $region18: #{tpu_custom_call.1} parent=0
    _
  %s4 = ssub.s32 1, %s2
  %s5 = scalar_select 0, %s4, %s2
  $region1: #{tpu_custom_call.1} parent=0
    #allocation2 [shape = 'u8[8192]{0}', space=vmem, size = 0x2000, scoped, tag = 'input window, operand 0, single buffered']
    #allocation3 [shape = 's32[1]{0}', space=sflag, size = 0x4, scoped, tag = 'scoped memory for tpu_custom_call.1']
    #allocation4 [shape = 's32[1]{0}', space=sflag, size = 0x4, scoped, tag = 'scoped memory for tpu_custom_call.1']
    #allocation5 [shape = 'u8[1024]{0}', space=vmem, size = 0x400, scoped, tag = 'output window, operand 0, single buffered']
    %6 = vsyncpa [#allocation3], 0
    %7 = vsyncpa [#allocation4], 0
    // Predicated region
    $region2: #{tpu_custom_call.1} parent=1 // pred_check
      _
    $region3: #{tpu_custom_call.1} parent=1 // pred_check_branch
      %9 = sbr.rel (0) target = $region5
    $region4: #{tpu_custom_call.1} parent=1 // pred_region
      %11 = vsyncadd [#allocation3], 0
      %s12 = sshll.u32 %s0, 4
      %s13 = int_to_ptr.hbm [resolvable:$true] %s12
      %s14 = sshll.u32 [#allocation2], 4
      %s15 = int_to_ptr.vmem [resolvable:$true] %s14
      %20 = dma.hbm_to_vmem [thread:$0]  %s13, 256, %s15, [#allocation3], 128, 128, 8
    $region5: #{tpu_custom_call.1} parent=1 // pred_fallthru
      _
    // Predicated region
    $region6: #{tpu_custom_call.1} parent=1 // pred_check
      _
    $region7: #{tpu_custom_call.1} parent=1 // pred_check_branch
      %22 = sbr.rel (0) target = $region9
    $region8: #{tpu_custom_call.1} parent=1 // pred_region
      %24 = dma.done [#allocation3], 256
    $region9: #{tpu_custom_call.1} parent=1 // pred_fallthru
      _
    %v25 = vld [vmem:[#allocation2] sm:$0x1]
    %v26 = vld [vmem:[#allocation2 + $0x8] sm:$0x1]
    %v29 = vrot.slane %v26, 7
    %vm30 = vcmask 1041409
    %v31 = vsel %vm30, %v29, %v25
    %vm33 = vcmask 254976
    %34 = vst.msk [vmem:[#allocation5] sm:$0x3] %vm33, %v31
    // Predicated region
    $region10: #{tpu_custom_call.1} parent=1 // pred_check
      _
    $region11: #{tpu_custom_call.1} parent=1 // pred_check_branch
      %36 = sbr.rel (0) target = $region13
    $region12: #{tpu_custom_call.1} parent=1 // pred_region
      %38 = vsyncadd [#allocation4], 0
      %s40 = sshll.u32 [#allocation5], 4
      %s41 = int_to_ptr.vmem [resolvable:$true] %s40
      %s42 = sshll.u32 %s1, 4
      %s43 = int_to_ptr.hbm [resolvable:$true] %s42
      %45 = dma.vmem_to_hbm [thread:$0]  %s41, 32, %s43, [#allocation4]
    $region13: #{tpu_custom_call.1} parent=1 // pred_fallthru
      _
    // Predicated region
    $region14: #{tpu_custom_call.1} parent=1 // pred_check
      _
    $region15: #{tpu_custom_call.1} parent=1 // pred_check_branch
      %47 = sbr.rel (0) target = $region17
    $region16: #{tpu_custom_call.1} parent=1 // pred_region
      %49 = dma.done [#allocation4], 32
    $region17: #{tpu_custom_call.1} parent=1 // pred_fallthru
      _
    %50 = vsyncpa [#allocation3], 1
    %51 = vsyncpa [#allocation4], 1

</llo_original>
